<compile_context>
chip_gen: v7x
topology: tpu7x:2x2x1
jax: 0.10.0
libtpu: 0.0.40
codegen_flags: <defaults>
</compile_context>

<pallas_src>
import functools

import jax
import jax.numpy as jnp
from jax.experimental import pallas as pl
from jax.experimental.pallas import tpu as pltpu

HIDDEN1 = 512
HIDDEN2 = 256


def mlp_kernel(x_ref, w1_ref, b1_ref, w23_ref, b23_ref, o_ref):
    # Layer 1: x @ w1 + b1, then ReLU.  bf16 operands, f32 accumulation.
    z1 = jnp.dot(x_ref[...], w1_ref[...], preferred_element_type=jnp.float32)
    a1 = jnp.maximum(z1 + b1_ref[...], 0.0).astype(jnp.bfloat16)
    # Fused layers 2+3: a1 @ (w2 @ w3) + (b2 @ w3 + b3).
    out = jnp.dot(a1, w23_ref[...], preferred_element_type=jnp.float32)
    o_ref[...] = (out + b23_ref[...]).astype(o_ref.dtype)


@functools.partial(jax.jit, static_argnames=("tb",))
def mlp_forward(x, w1, b1, w2, b2, w3, b3, *, tb=128):
    """x: (B, input_size); weights are [in, out]; biases are (1, out). f32 in/out."""
    B, K = x.shape
    out_size = w3.shape[1]

    # --- host-side algebraic fusion of the two activation-free linears (exact) ---
    w23 = w2 @ w3                      # (512, out)
    b23 = b2 @ w3 + b3                 # (1, out)

    # --- lane-dense output: pad the output feature dim to a multiple of 128 ---
    out_pad = max(128, pl.cdiv(out_size, 128) * 128)
    if out_pad != out_size:
        w23 = jnp.pad(w23, ((0, 0), (0, out_pad - out_size)))
        b23 = jnp.pad(b23, ((0, 0), (0, out_pad - out_size)))

    # --- batch tile: multiple of 16 (bf16 sublane packing), pad batch up to it ---
    tb_eff = min(tb, max(16, pl.cdiv(B, 16) * 16))
    b_padded = pl.cdiv(B, tb_eff) * tb_eff
    if b_padded != B:
        x = jnp.pad(x, ((0, b_padded - B), (0, 0)))

    # --- bf16 operands for the MXU, biases stay f32 ---
    x_bf = x.astype(jnp.bfloat16)
    w1_bf = w1.astype(jnp.bfloat16)
    w23_bf = w23.astype(jnp.bfloat16)
    b1_f = b1.astype(jnp.float32)
    b23_f = b23.astype(jnp.float32)

    grid = (b_padded // tb_eff,)

    cost = pl.CostEstimate(
        flops=2 * b_padded * (K * HIDDEN1 + HIDDEN1 * out_pad),
        transcendentals=0,
        bytes_accessed=(x_bf.size * 2 + w1_bf.size * 2 + w23_bf.size * 2
                        + b1_f.size * 4 + b23_f.size * 4
                        + b_padded * out_pad * 4),
    )

    out = pl.pallas_call(
        mlp_kernel,
        out_shape=jax.ShapeDtypeStruct((b_padded, out_pad), jnp.float32),
        grid_spec=pltpu.PrefetchScalarGridSpec(
            num_scalar_prefetch=0,
            grid=grid,
            in_specs=[
                pl.BlockSpec((tb_eff, K), lambda i: (i, 0)),          # x tile
                pl.BlockSpec((K, HIDDEN1), lambda i: (0, 0)),         # w1 (resident)
                pl.BlockSpec((1, HIDDEN1), lambda i: (0, 0)),         # b1 (resident)
                pl.BlockSpec((HIDDEN1, out_pad), lambda i: (0, 0)),   # w23 (resident)
                pl.BlockSpec((1, out_pad), lambda i: (0, 0)),         # b23 (resident)
            ],
            out_specs=pl.BlockSpec((tb_eff, out_pad), lambda i: (i, 0)),
        ),
        compiler_params=pltpu.CompilerParams(
            dimension_semantics=("parallel",),
        ),
        cost_estimate=cost,
    )(x_bf, w1_bf, b1_f, w23_bf, b23_f)

    # strip batch / lane padding
    return out[:B, :out_size]


def make_params(key, input_size, output_size):
    """Deterministic init mirroring nn.Linear shapes (weights stored [in, out])."""
    k1, k2, k3, k4, k5, k6 = jax.random.split(key, 6)

    def kaiming_uniform(k, fan_in, shape):
        # kaiming_uniform_ with nonlinearity='relu': bound = sqrt(6 / fan_in)
        bound = jnp.sqrt(6.0 / fan_in)
        return jax.random.uniform(k, shape, jnp.float32, -bound, bound)

    def bias_uniform(k, fan_in, shape):
        bound = 1.0 / jnp.sqrt(fan_in)
        return jax.random.uniform(k, shape, jnp.float32, -bound, bound)

    w1 = kaiming_uniform(k1, input_size, (input_size, HIDDEN1))
    b1 = bias_uniform(k2, input_size, (1, HIDDEN1))
    w2 = kaiming_uniform(k3, HIDDEN1, (HIDDEN1, HIDDEN2))
    b2 = bias_uniform(k4, HIDDEN1, (1, HIDDEN2))
    w3 = kaiming_uniform(k5, HIDDEN2, (HIDDEN2, output_size))
    b3 = bias_uniform(k6, HIDDEN2, (1, output_size))
    return w1, b1, w2, b2, w3, b3


def reference_forward_f32(x, w1, b1, w2, b2, w3, b3):
    """Unfused f32 reference (matches the original torch module's math)."""
    z1 = x @ w1 + b1
    z2 = jnp.maximum(z1, 0.0) @ w2 + b2
    return z2 @ w3 + b3


def reference_forward_bf16_fused(x, w1, b1, w2, b2, w3, b3):
    """Same math the kernel performs (bf16 matmuls, f32 accumulation, fused tail)."""
    w23 = (w2 @ w3).astype(jnp.bfloat16)
    b23 = b2 @ w3 + b3
    a1 = jnp.maximum(
        jnp.dot(x.astype(jnp.bfloat16), w1.astype(jnp.bfloat16),
                preferred_element_type=jnp.float32) + b1, 0.0
    ).astype(jnp.bfloat16)
    return jnp.dot(a1, w23, preferred_element_type=jnp.float32) + b23


if __name__ == "__main__":
    batch = 256          # exercises the batch grid (2 tiles of 128)
    input_size = 32
    output_size = 16

    key = jax.random.PRNGKey(0)
    kx, kp = jax.random.split(key)
    x = jax.random.normal(kx, (batch, input_size), jnp.float32)
    params = make_params(kp, input_size, output_size)

    out = mlp_forward(x, *params)
    jax.block_until_ready(out)
    assert out.shape == (batch, output_size)

    # Tight check vs. the kernel's own math in plain JAX.
    ref_bf = reference_forward_bf16_fused(x, *params)
    assert jnp.allclose(out, ref_bf, atol=1e-3, rtol=1e-3), "mismatch vs bf16 reference"

    # Looser check vs. the original (unfused, f32) module semantics.
    ref_f32 = reference_forward_f32(x, *params)
    assert jnp.allclose(out, ref_f32, atol=5e-2, rtol=5e-2), "mismatch vs f32 reference"

    print("KERNEL_OK")
</pallas_src>

<mosaic_0001>
module attributes {stable_mosaic.version = 11 : i64} {
  func.func @mlp_kernel(%arg0: i32, %arg1: memref<128x32xbf16, #tpu.memory_space<vmem>>, %arg2: memref<32x512xbf16, #tpu.memory_space<vmem>>, %arg3: memref<1x512xf32, #tpu.memory_space<vmem>>, %arg4: memref<512x128xbf16, #tpu.memory_space<vmem>>, %arg5: memref<1x128xf32, #tpu.memory_space<vmem>>, %arg6: memref<128x128xf32, #tpu.memory_space<vmem>>) attributes {dimension_semantics = [#tpu.dimension_semantics<parallel>], iteration_bounds = array<i64: 2>, scalar_prefetch = 0 : i64, scratch_operands = 0 : i64, tpu.core_type = #tpu.core_type<tc>, window_params = [{transform_indices = @transform_0, window_bounds = array<i64: 128, 32>}, {pipeline_mode = #tpu.pipeline_mode<synchronous>, transform_indices = @transform_1, window_bounds = array<i64: 32, 512>}, {pipeline_mode = #tpu.pipeline_mode<synchronous>, transform_indices = @transform_2, window_bounds = array<i64: 1, 512>}, {pipeline_mode = #tpu.pipeline_mode<synchronous>, transform_indices = @transform_3, window_bounds = array<i64: 512, 128>}, {pipeline_mode = #tpu.pipeline_mode<synchronous>, transform_indices = @transform_4, window_bounds = array<i64: 1, 128>}, {transform_indices = @transform_5, window_bounds = array<i64: 128, 128>}]} {
    %c0 = arith.constant 0 : index
    %c0_0 = arith.constant 0 : index
    %0 = vector.load %arg1[%c0, %c0_0] : memref<128x32xbf16, #tpu.memory_space<vmem>>, vector<128x32xbf16>
    %c0_1 = arith.constant 0 : index
    %c0_2 = arith.constant 0 : index
    %1 = vector.load %arg2[%c0_1, %c0_2] : memref<32x512xbf16, #tpu.memory_space<vmem>>, vector<32x512xbf16>
    %cst = arith.constant dense<0.000000e+00> : vector<128x512xf32>
    %2 = tpu.matmul %0, %1, %cst {dimension_numbers = #tpu.dot_dimension_numbers<[1], [0], [0], [1], [0, 0, 1, 1], [], []>} : vector<128x32xbf16>, vector<32x512xbf16>, vector<128x512xf32> -> vector<128x512xf32>
    %c0_3 = arith.constant 0 : index
    %c0_4 = arith.constant 0 : index
    %3 = vector.load %arg3[%c0_3, %c0_4] : memref<1x512xf32, #tpu.memory_space<vmem>>, vector<1x512xf32>
    %4 = vector.broadcast %3 : vector<1x512xf32> to vector<128x512xf32>
    %5 = arith.addf %2, %4 : vector<128x512xf32>
    %cst_5 = arith.constant 0.000000e+00 : f32
    %6 = vector.broadcast %cst_5 : f32 to vector<128x512xf32>
    %7 = arith.maximumf %5, %6 : vector<128x512xf32>
    %8 = arith.truncf %7 : vector<128x512xf32> to vector<128x512xbf16>
    %c0_6 = arith.constant 0 : index
    %c0_7 = arith.constant 0 : index
    %9 = vector.load %arg4[%c0_6, %c0_7] : memref<512x128xbf16, #tpu.memory_space<vmem>>, vector<512x128xbf16>
    %cst_8 = arith.constant dense<0.000000e+00> : vector<128x128xf32>
    %10 = tpu.matmul %8, %9, %cst_8 {dimension_numbers = #tpu.dot_dimension_numbers<[1], [0], [0], [1], [0, 0, 1, 1], [], []>} : vector<128x512xbf16>, vector<512x128xbf16>, vector<128x128xf32> -> vector<128x128xf32>
    %c0_9 = arith.constant 0 : index
    %c0_10 = arith.constant 0 : index
    %11 = vector.load %arg5[%c0_9, %c0_10] : memref<1x128xf32, #tpu.memory_space<vmem>>, vector<1x128xf32>
    %12 = vector.broadcast %11 : vector<1x128xf32> to vector<128x128xf32>
    %13 = arith.addf %10, %12 : vector<128x128xf32>
    %c0_11 = arith.constant 0 : index
    %c0_12 = arith.constant 0 : index
    %14 = vector.load %arg6[%c0_11, %c0_12] : memref<128x128xf32, #tpu.memory_space<vmem>>, vector<128x128xf32>
    tpu.vector_store %arg6[%c0_11, %c0_12], %13 {strides = array<i32>} : memref<128x128xf32, #tpu.memory_space<vmem>>, vector<128x128xf32>,
    return
  }
  func.func @transform_0(%arg0: i32) -> (i32, i32) {
    %c0_i32 = arith.constant 0 : i32
    %c0_i32_0 = arith.constant 0 : i32
    return %arg0, %c0_i32 : i32, i32
  }
  func.func @transform_1(%arg0: i32) -> (i32, i32) {
    %c0_i32 = arith.constant 0 : i32
    %c0_i32_0 = arith.constant 0 : i32
    %c0_i32_1 = arith.constant 0 : i32
    return %c0_i32, %c0_i32_0 : i32, i32
  }
  func.func @transform_2(%arg0: i32) -> (i32, i32) {
    %c0_i32 = arith.constant 0 : i32
    %c0_i32_0 = arith.constant 0 : i32
    %c0_i32_1 = arith.constant 0 : i32
    return %c0_i32, %c0_i32_0 : i32, i32
  }
  func.func @transform_3(%arg0: i32) -> (i32, i32) {
    %c0_i32 = arith.constant 0 : i32
    %c0_i32_0 = arith.constant 0 : i32
    %c0_i32_1 = arith.constant 0 : i32
    return %c0_i32, %c0_i32_0 : i32, i32
  }
  func.func @transform_4(%arg0: i32) -> (i32, i32) {
    %c0_i32 = arith.constant 0 : i32
    %c0_i32_0 = arith.constant 0 : i32
    %c0_i32_1 = arith.constant 0 : i32
    return %c0_i32, %c0_i32_0 : i32, i32
  }
  func.func @transform_5(%arg0: i32) -> (i32, i32) {
    %c0_i32 = arith.constant 0 : i32
    %c0_i32_0 = arith.constant 0 : i32
    return %arg0, %c0_i32 : i32, i32
  }
}

</mosaic_0001>

<llo_original>
// kernel: mlp_forward.1
$region0: #{mlp_forward.1}
  #allocation0 [shape = 'u32[]', space=smem, size = 0x4, offset = 0x4, fixed_abs, tag = 'smem constant byte address 0x4 - core index']
  #allocation1 [shape = 'u32[144,128]{1,0:T(1,128)}', space=vmem, size = 0x12000, scoped, tag = 'internal scratch']
  %s0 = inlined_call_operand.vmem [shape: bf16[256,32], index: 0, kind: input, shape index: {}]
  %s1 = inlined_call_operand.vmem [shape: bf16[32,512], index: 1, kind: input, shape index: {}]
  %s2 = inlined_call_operand.vmem [shape: f32[1,512], index: 2, kind: input, shape index: {}]
  %s3 = inlined_call_operand.vmem [shape: bf16[512,128], index: 3, kind: input, shape index: {}]
  %s4 = inlined_call_operand.vmem [shape: f32[1,128], index: 4, kind: input, shape index: {}]
  %s5 = inlined_call_operand.vmem [shape: f32[256,128], index: 5, kind: output, shape index: {}]
  %s6 = sld [smem:[#allocation0]]
  $region53: #{mlp_forward.1} parent=0
    _
  %s8 = ssub.s32 1, %s6
  %s9 = scalar_select 0, %s8, %s6
  loop: start=0, step=1, limit=4
  $region2: #{mlp_forward.1} parent=0 // loop_pre_header
    _
  $region3: #{mlp_forward.1} parent=0 // loop_header
    %s11 = sphi 0, %s15
    %p12 = scmp.ge.s32.totalorder %s11, 4
    %s21 = sphi 0, %s23
    %s24 = sphi 0, %s21
    %s25 = sphi 0, %s24
    %s41 = sphi 0, %s25
    %s45 = sphi 0, %s45
    %s47 = sphi 0, %s45
    %s48 = sphi 0, %s47
    %s62 = sphi 0, %s48
    %s66 = sphi 0, %s66
    %s68 = sphi 0, %s66
    %s69 = sphi 0, %s68
    %s83 = sphi 0, %s69
    %s87 = sphi 0, %s87
    %s89 = sphi 0, %s87
    %s90 = sphi 0, %s89
    %s104 = sphi 0, %s90
    %s108 = sphi 0, %s108
    %s110 = sphi 0, %s108
    %s111 = sphi 0, %s110
    %s125 = sphi 0, %s111
    %s131 = sphi 0, %s133
    %s134 = sphi 0, %s131
    %s135 = sphi 0, %s134
    %s151 = sphi 0, %s135
  $region4: #{mlp_forward.1} parent=0 // loop_header_branch
    %14 = sbr.rel (%p12) target = $region8
  $region5: #{mlp_forward.1} parent=0 // loop_body
    %s16 = ssub.s32 %s11, 1
    %s17 = ssub.s32 %s11, 2
    %s18 = sadd.s32 %s11, 1
    %s19 = ssub.s32 %s11, %s18
    %p20 = scmp.eq.s32.totalorder %s19, 0
    %s22 = sadd.s32 %s21, 1
    %s23 = scalar_select %p20, %s21, %s22
    %p26 = pneg %p20
    %p27 = scmp.eq.s32.totalorder %s11, 1
    %p28 = por %p26, %p27
    %p29 = scmp.ne.s32.totalorder %s21, %s24
    %p30 = scmp.eq.s32.totalorder %s11, 0
    %p31 = por %p29, %p30
    %p32 = scmp.ne.s32.totalorder %s21, %s24
    %p33 = scmp.eq.s32.totalorder %s16, 1
    %p34 = por %p32, %p33
    %p35 = scmp.ne.s32.totalorder %s24, %s25
    %p36 = scmp.eq.s32.totalorder %s16, 0
    %p37 = por %p35, %p36
    %p38 = scmp.ne.s32.totalorder %s24, %s25
    %p39 = scmp.eq.s32.totalorder %s17, 1
    %p40 = por %p38, %p39
    %p42 = scmp.ne.s32.totalorder %s25, %s41
    %p43 = scmp.eq.s32.totalorder %s17, 0
    %p44 = por %p42, %p43
    %s46 = sadd.s32 %s45, 1
    %p49 = scmp.eq.s32.totalorder %s11, 1
    %p50 = scmp.ne.s32.totalorder %s45, %s47
    %p51 = scmp.eq.s32.totalorder %s11, 0
    %p52 = por %p50, %p51
    %p53 = scmp.ne.s32.totalorder %s45, %s47
    %p54 = scmp.eq.s32.totalorder %s16, 1
    %p55 = por %p53, %p54
    %p56 = scmp.ne.s32.totalorder %s47, %s48
    %p57 = scmp.eq.s32.totalorder %s16, 0
    %p58 = por %p56, %p57
    %p59 = scmp.ne.s32.totalorder %s47, %s48
    %p60 = scmp.eq.s32.totalorder %s17, 1
    %p61 = por %p59, %p60
    %p63 = scmp.ne.s32.totalorder %s48, %s62
    %p64 = scmp.eq.s32.totalorder %s17, 0
    %p65 = por %p63, %p64
    %s67 = sadd.s32 %s66, 1
    %p70 = scmp.eq.s32.totalorder %s11, 1
    %p71 = scmp.ne.s32.totalorder %s66, %s68
    %p72 = scmp.eq.s32.totalorder %s11, 0
    %p73 = por %p71, %p72
    %p74 = scmp.ne.s32.totalorder %s66, %s68
    %p75 = scmp.eq.s32.totalorder %s16, 1
    %p76 = por %p74, %p75
    %p77 = scmp.ne.s32.totalorder %s68, %s69
    %p78 = scmp.eq.s32.totalorder %s16, 0
    %p79 = por %p77, %p78
    %p80 = scmp.ne.s32.totalorder %s68, %s69
    %p81 = scmp.eq.s32.totalorder %s17, 1
    %p82 = por %p80, %p81
    %p84 = scmp.ne.s32.totalorder %s69, %s83
    %p85 = scmp.eq.s32.totalorder %s17, 0
    %p86 = por %p84, %p85
    %s88 = sadd.s32 %s87, 1
    %p91 = scmp.eq.s32.totalorder %s11, 1
    %p92 = scmp.ne.s32.totalorder %s87, %s89
    %p93 = scmp.eq.s32.totalorder %s11, 0
    %p94 = por %p92, %p93
    %p95 = scmp.ne.s32.totalorder %s87, %s89
    %p96 = scmp.eq.s32.totalorder %s16, 1
    %p97 = por %p95, %p96
    %p98 = scmp.ne.s32.totalorder %s89, %s90
    %p99 = scmp.eq.s32.totalorder %s16, 0
    %p100 = por %p98, %p99
    %p101 = scmp.ne.s32.totalorder %s89, %s90
    %p102 = scmp.eq.s32.totalorder %s17, 1
    %p103 = por %p101, %p102
    %p105 = scmp.ne.s32.totalorder %s90, %s104
    %p106 = scmp.eq.s32.totalorder %s17, 0
    %p107 = por %p105, %p106
    %s109 = sadd.s32 %s108, 1
    %p112 = scmp.eq.s32.totalorder %s11, 1
    %p113 = scmp.ne.s32.totalorder %s108, %s110
    %p114 = scmp.eq.s32.totalorder %s11, 0
    %p115 = por %p113, %p114
    %p116 = scmp.ne.s32.totalorder %s108, %s110
    %p117 = scmp.eq.s32.totalorder %s16, 1
    %p118 = por %p116, %p117
    %p119 = scmp.ne.s32.totalorder %s110, %s111
    %p120 = scmp.eq.s32.totalorder %s16, 0
    %p121 = por %p119, %p120
    %p122 = scmp.ne.s32.totalorder %s110, %s111
    %p123 = scmp.eq.s32.totalorder %s17, 1
    %p124 = por %p122, %p123
    %p126 = scmp.ne.s32.totalorder %s111, %s125
    %p127 = scmp.eq.s32.totalorder %s17, 0
    %p128 = por %p126, %p127
    %s129 = ssub.s32 %s11, %s18
    %p130 = scmp.eq.s32.totalorder %s129, 0
    %s132 = sadd.s32 %s131, 1
    %s133 = scalar_select %p130, %s131, %s132
    %p136 = pneg %p130
    %p137 = scmp.eq.s32.totalorder %s11, 1
    %p138 = por %p136, %p137
    %p139 = scmp.ne.s32.totalorder %s131, %s134
    %p140 = scmp.eq.s32.totalorder %s11, 0
    %p141 = por %p139, %p140
    %p142 = scmp.ne.s32.totalorder %s131, %s134
    %p143 = scmp.eq.s32.totalorder %s16, 1
    %p144 = por %p142, %p143
    %p145 = scmp.ne.s32.totalorder %s134, %s135
    %p146 = scmp.eq.s32.totalorder %s16, 0
    %p147 = por %p145, %p146
    %p148 = scmp.ne.s32.totalorder %s134, %s135
    %p149 = scmp.eq.s32.totalorder %s17, 1
    %p150 = por %p148, %p149
    %p152 = scmp.ne.s32.totalorder %s135, %s151
    %p153 = scmp.eq.s32.totalorder %s17, 0
    %p154 = por %p152, %p153
    %p155 = scmp.le.s32.totalorder 1, %s11
    %p156 = scmp.lt.s32.totalorder %s11, 3
    %p157 = pnand %p155, %p156
    %p158 = pneg %p157
    // Predicated region
    $region9: #{mlp_forward.1} parent=5 // pred_check
      _
    $region10: #{mlp_forward.1} parent=5 // pred_check_branch
      %160 = sbr.rel (%p157) target = $region12
    $region11: #{mlp_forward.1} parent=5 // pred_region
      %s161 = ssub.s32 %s11, 1
      // Predicated region
      $region13: #{mlp_forward.1} parent=11 // pred_check
        %p162 = pneg %p58
      $region14: #{mlp_forward.1} parent=11 // pred_check_branch
        %164 = sbr.rel (%p162) target = $region16
      $region15: #{mlp_forward.1} parent=11 // pred_region
        _
      $region16: #{mlp_forward.1} parent=11 // pred_fallthru
        _
      // Predicated region
      $region17: #{mlp_forward.1} parent=11 // pred_check
        %p165 = pneg %p79
      $region18: #{mlp_forward.1} parent=11 // pred_check_branch
        %167 = sbr.rel (%p165) target = $region20
      $region19: #{mlp_forward.1} parent=11 // pred_region
        _
      $region20: #{mlp_forward.1} parent=11 // pred_fallthru
        _
      // Predicated region
      $region21: #{mlp_forward.1} parent=11 // pred_check
        %p168 = pneg %p100
      $region22: #{mlp_forward.1} parent=11 // pred_check_branch
        %170 = sbr.rel (%p168) target = $region24
      $region23: #{mlp_forward.1} parent=11 // pred_region
        _
      $region24: #{mlp_forward.1} parent=11 // pred_fallthru
        _
      // Predicated region
      $region25: #{mlp_forward.1} parent=11 // pred_check
        %p171 = pneg %p121
      $region26: #{mlp_forward.1} parent=11 // pred_check_branch
        %173 = sbr.rel (%p171) target = $region28
      $region27: #{mlp_forward.1} parent=11 // pred_region
        _
      $region28: #{mlp_forward.1} parent=11 // pred_fallthru
        _
    $region12: #{mlp_forward.1} parent=5 // pred_fallthru
      _
    %p174 = scmp.lt.s32.totalorder %s11, 2
    // Predicated region
    $region29: #{mlp_forward.1} parent=5 // pred_check
      %p175 = pneg %p174
    $region30: #{mlp_forward.1} parent=5 // pred_check_branch
      %177 = sbr.rel (%p175) target = $region32
    $region31: #{mlp_forward.1} parent=5 // pred_region
      // Predicated region
      $region33: #{mlp_forward.1} parent=31 // pred_check
        %p178 = pneg %p31
      $region34: #{mlp_forward.1} parent=31 // pred_check_branch
        %180 = sbr.rel (%p178) target = $region36
      $region35: #{mlp_forward.1} parent=31 // pred_region
        %s181 = smul.u32 16, %s11
        %p182 = scmp.lt.s32.totalorder %s181, 31
        %s183 = scalar_select %p182, %s181, 31
        %s184 = smul.addr %s183, 4
        %s185 = scalar_lea.vmem %s0, %s184
        %s186 = smul.u32 16, %s11
      $region36: #{mlp_forward.1} parent=31 // pred_fallthru
        _
    $region32: #{mlp_forward.1} parent=5 // pred_fallthru
      _
    %p187 = scmp.le.s32.totalorder 1, %s11
    %p188 = scmp.lt.s32.totalorder %s11, 3
    %p189 = pnand %p187, %p188
    %p190 = pneg %p189
    // Predicated region
    $region37: #{mlp_forward.1} parent=5 // pred_check
      _
    $region38: #{mlp_forward.1} parent=5 // pred_check_branch
      %192 = sbr.rel (%p189) target = $region40
    $region39: #{mlp_forward.1} parent=5 // pred_region
      %s193 = ssub.s32 %s11, 1
      %s194 = smul.u32 16, %s16
      %p195 = scmp.lt.s32.totalorder %s194, 31
      %s196 = scalar_select %p195, %s194, 31
      %s197 = smul.addr %s196, 4
      %s198 = scalar_lea.vmem %s0, %s197
      %p199 = pneg %p37
      %p200 = pneg %p34
      %p201 = pneg %p58
      %p202 = pneg %p55
      %p203 = pneg %p79
      %p204 = pneg %p76
      %p205 = pneg %p100
      %p206 = pneg %p97
      %p207 = pneg %p121
      %p208 = pneg %p118
      %p209 = pneg %p147
      %p210 = pneg %p144
      %s211 = smul.u32 16, %s16
      %p212 = scmp.lt.s32.totalorder %s211, 31
      %s213 = scalar_select %p212, %s211, 31
      %s214 = smul.addr %s213, 8
      %s215 = scalar_lea.vmem %s5, %s214
      %s216 = smul.u32 16, %s16
      %p217 = scmp.lt.s32.totalorder %s216, 31
      %s218 = scalar_select %p217, %s216, 31
      %s219 = smul.addr %s218, 4
      %s220 = scalar_lea.vmem %s0, %s219
      %s221 = smul.u32 16, %s16
      %s222 = smul.u32 16, %s16
      %p223 = scmp.lt.s32.totalorder %s222, 31
      %s224 = scalar_select %p223, %s222, 31
      %s225 = smul.addr %s224, 8
      %s226 = scalar_lea.vmem %s5, %s225
      %s227 = smul.u32 16, %s16
      %v229 = vld [vmem:[%s220] sm:$0xf]
      %v230 = vld [vmem:[%s220 + $0x4] sm:$0xf]
      %v231 = vld [vmem:[%s220 + $0x8] sm:$0xf]
      %v232 = vld [vmem:[%s220 + $0xc] sm:$0xf]
      %v233 = vld [vmem:[%s220 + $0x10] sm:$0xf]
      %v234 = vld [vmem:[%s220 + $0x14] sm:$0xf]
      %v235 = vld [vmem:[%s220 + $0x18] sm:$0xf]
      %v236 = vld [vmem:[%s220 + $0x1c] sm:$0xf]
      %v237 = vld [vmem:[%s220 + $0x20] sm:$0xf]
      %v238 = vld [vmem:[%s220 + $0x24] sm:$0xf]
      %v239 = vld [vmem:[%s220 + $0x28] sm:$0xf]
      %v240 = vld [vmem:[%s220 + $0x2c] sm:$0xf]
      %v241 = vld [vmem:[%s220 + $0x30] sm:$0xf]
      %v242 = vld [vmem:[%s220 + $0x34] sm:$0xf]
      %v243 = vld [vmem:[%s220 + $0x38] sm:$0xf]
      %v244 = vld [vmem:[%s220 + $0x3c] sm:$0xf]
      %v245 = vld [vmem:[%s1] sm:$0xff]
      %v246 = vld [vmem:[%s1 + $0x8] sm:$0xff]
      %v247 = vld [vmem:[%s1 + $0x10] sm:$0xff]
      %v248 = vld [vmem:[%s1 + $0x18] sm:$0xff]
      %v249 = vld [vmem:[%s1 + $0x20] sm:$0xff]
      %v250 = vld [vmem:[%s1 + $0x28] sm:$0xff]
      %v251 = vld [vmem:[%s1 + $0x30] sm:$0xff]
      %v252 = vld [vmem:[%s1 + $0x38] sm:$0xff]
      %v253 = vld [vmem:[%s2] sm:$0xf]
      %v255 = vlaneseq
      %v256 = vshrl.u32 %v255, 7
      %v257 = vsub.s32 0, %v256
      %v258 = vrot.slane %v253, %v257
      %v259 = vlaneseq
      %v260 = vshrl.u32 %v259, 7
      %v261 = vsub.s32 1, %v260
      %v262 = vrot.slane %v253, %v261
      %v263 = vlaneseq
      %v264 = vshrl.u32 %v263, 7
      %v265 = vsub.s32 2, %v264
      %v266 = vrot.slane %v253, %v265
      %v267 = vlaneseq
      %v268 = vshrl.u32 %v267, 7
      %v269 = vsub.s32 3, %v268
      %v270 = vrot.slane %v253, %v269
      %v291 = vunpack.c.l.b16 %v229
      %v292 = vunpack.c.l.b16 %v230
      %v293 = vunpack.c.l.b16 %v231
      %v294 = vunpack.c.l.b16 %v232
      %v295 = vunpack.c.l.b16 %v233
      %v296 = vunpack.c.l.b16 %v234
      %v297 = vunpack.c.l.b16 %v235
      %v298 = vunpack.c.l.b16 %v236
      %v299 = vunpack.c.l.b16 %v237
      %v300 = vunpack.c.l.b16 %v238
      %v301 = vunpack.c.l.b16 %v239
      %v302 = vunpack.c.l.b16 %v240
      %v303 = vunpack.c.l.b16 %v241
      %v304 = vunpack.c.l.b16 %v242
      %v305 = vunpack.c.l.b16 %v243
      %v306 = vunpack.c.l.b16 %v244
      %v307 = vpack.c.b16 %v292, %v291
      %v308 = vpack.c.b16 %v294, %v293
      %v309 = vpack.c.b16 %v296, %v295
      %v310 = vpack.c.b16 %v298, %v297
      %v311 = vpack.c.b16 %v300, %v299
      %v312 = vpack.c.b16 %v302, %v301
      %v313 = vpack.c.b16 %v304, %v303
      %v314 = vpack.c.b16 %v306, %v305
      %v323 = vunpack.c.l.b16 %v245
      %v324 = vunpack.c.h.b16 %v245
      %v325 = vunpack.c.l.b16 %v246
      %v326 = vunpack.c.h.b16 %v246
      %v327 = vunpack.c.l.b16 %v247
      %v328 = vunpack.c.h.b16 %v247
      %v329 = vunpack.c.l.b16 %v248
      %v330 = vunpack.c.h.b16 %v248
      %v331 = vunpack.c.l.b16 %v249
      %v332 = vunpack.c.h.b16 %v249
      %v333 = vunpack.c.l.b16 %v250
      %v334 = vunpack.c.h.b16 %v250
      %v335 = vunpack.c.l.b16 %v251
      %v336 = vunpack.c.h.b16 %v251
      %v337 = vunpack.c.l.b16 %v252
      %v338 = vunpack.c.h.b16 %v252
      %v339 = vpack.c.b16 %v327, %v323
      %v340 = vpack.c.b16 %v328, %v324
      %v341 = vpack.c.b16 %v329, %v325
      %v342 = vpack.c.b16 %v330, %v326
      %v343 = vpack.c.b16 %v335, %v331
      %v344 = vpack.c.b16 %v336, %v332
      %v345 = vpack.c.b16 %v337, %v333
      %v346 = vpack.c.b16 %v338, %v334
      %vm355 = vcmask 261120
      %v357 = vsel %vm355, %v307, 0
      %v360 = vsel %vm355, %v308, 0
      %v363 = vsel %vm355, %v309, 0
      %v366 = vsel %vm355, %v310, 0
      %v369 = vsel %vm355, %v311, 0
      %v372 = vsel %vm355, %v312, 0
      %v375 = vsel %vm355, %v313, 0
      %v378 = vsel %vm355, %v314, 0
      %380 = vmatprep.subr.bf16.mxu0 %v340
      %381 = vmatpush1.bf16.msra.mxu0 %v339
      %382 = vmatprep.subr.bf16.mxu0 %v344
      %383 = vmatpush1.bf16.msra.mxu0 %v343
      %384 = vmatprep.subr.bf16.mxu0 0
      %385 = vmatpush1.bf16.msra.mxu0 0
      %386 = vmatprep.subr.bf16.mxu0 0
      %387 = vmatpush1.bf16.msra.mxu0 0
      %388 = vmatprep.subr.bf16.mxu0 0
      %389 = vmatpush1.bf16.msra.mxu0 0
      %390 = vmatprep.subr.bf16.mxu0 0
      %391 = vmatpush1.bf16.msra.mxu0 0
      %392 = vmatprep.subr.bf16.mxu0 0
      %393 = vmatpush1.bf16.msra.mxu0 0
      %394 = vmatprep.subr.bf16.mxu0 0
      %395 = vmatpush1.bf16.msra.mxu0 0
      %396 = vmatprep.subr.bf16.mxu0 0
      %397 = vmatpush1.bf16.msra.mxu0 0
      %398 = vmatprep.subr.bf16.mxu0 0
      %399 = vmatpush1.bf16.msra.mxu0 0
      %400 = vmatprep.subr.bf16.mxu0 0
      %401 = vmatpush1.bf16.msra.mxu0 0
      %402 = vmatprep.subr.bf16.mxu0 0
      %403 = vmatpush1.bf16.msra.mxu0 0
      %404 = vmatprep.subr.bf16.mxu0 0
      %405 = vmatpush1.bf16.msra.mxu0 0
      %406 = vmatprep.subr.bf16.mxu0 0
      %407 = vmatpush1.bf16.msra.mxu0 0
      %408 = vmatprep.subr.bf16.mxu0 0
      %409 = vmatpush1.bf16.msra.mxu0 0
      %410 = vmatprep.subr.bf16.mxu0 0
      %411 = vmatpush1.bf16.msra.mxu0 0
      %412 = vmatprep.mubr.bf16.mxu0 0
      %413 = vmatmul.mubr.bf16.gmra.mrb[0].mxu0 %v357
      %v414 = vpop.f32.mrb[0].mxu0
      %v415 = vadd.f32 %v258, %v414
      %v416 = vpop.f32.mrb[0].mxu0
      %v417 = vadd.f32 %v262, %v416
      %v418 = vpop.f32.mrb[0].mxu0
      %v419 = vadd.f32 %v258, %v418
      %v420 = vpop.f32.mrb[0].mxu0
      %v421 = vadd.f32 %v262, %v420
      %422 = vmatprep.mubr.bf16.mxu0 0
      %423 = vmatmul.mubr.bf16.gmra.mrb[0].mxu0 %v360
      %v424 = vpop.f32.mrb[0].mxu0
      %v425 = vadd.f32 %v258, %v424
      %v426 = vpop.f32.mrb[0].mxu0
      %v427 = vadd.f32 %v262, %v426
      %v428 = vpop.f32.mrb[0].mxu0
      %v429 = vadd.f32 %v258, %v428
      %v430 = vpop.f32.mrb[0].mxu0
      %v431 = vadd.f32 %v262, %v430
      %432 = vmatprep.mubr.bf16.mxu0 0
      %433 = vmatmul.mubr.bf16.gmra.mrb[0].mxu0 %v363
      %v434 = vpop.f32.mrb[0].mxu0
      %v435 = vadd.f32 %v258, %v434
      %v436 = vpop.f32.mrb[0].mxu0
      %v437 = vadd.f32 %v262, %v436
      %v438 = vpop.f32.mrb[0].mxu0
      %v439 = vadd.f32 %v258, %v438
      %v440 = vpop.f32.mrb[0].mxu0
      %v441 = vadd.f32 %v262, %v440
      %442 = vmatprep.mubr.bf16.mxu0 0
      %443 = vmatmul.mubr.bf16.gmra.mrb[0].mxu0 %v366
      %v444 = vpop.f32.mrb[0].mxu0
      %v445 = vadd.f32 %v258, %v444
      %v446 = vpop.f32.mrb[0].mxu0
      %v447 = vadd.f32 %v262, %v446
      %v448 = vpop.f32.mrb[0].mxu0
      %v449 = vadd.f32 %v258, %v448
      %v450 = vpop.f32.mrb[0].mxu0
      %v451 = vadd.f32 %v262, %v450
      %452 = vmatprep.mubr.bf16.mxu0 0
      %453 = vmatmul.mubr.bf16.gmra.mrb[0].mxu0 %v369
      %v454 = vpop.f32.mrb[0].mxu0
      %v455 = vadd.f32 %v258, %v454
      %v456 = vpop.f32.mrb[0].mxu0
      %v457 = vadd.f32 %v262, %v456
      %v458 = vpop.f32.mrb[0].mxu0
      %v459 = vadd.f32 %v258, %v458
      %v460 = vpop.f32.mrb[0].mxu0
      %v461 = vadd.f32 %v262, %v460
      %462 = vmatprep.mubr.bf16.mxu0 0
      %463 = vmatmul.mubr.bf16.gmra.mrb[0].mxu0 %v372
      %v464 = vpop.f32.mrb[0].mxu0
      %v465 = vadd.f32 %v258, %v464
      %v466 = vpop.f32.mrb[0].mxu0
      %v467 = vadd.f32 %v262, %v466
      %v468 = vpop.f32.mrb[0].mxu0
      %v469 = vadd.f32 %v258, %v468
      %v470 = vpop.f32.mrb[0].mxu0
      %v471 = vadd.f32 %v262, %v470
      %472 = vmatprep.mubr.bf16.mxu0 0
      %473 = vmatmul.mubr.bf16.gmra.mrb[0].mxu0 %v375
      %v474 = vpop.f32.mrb[0].mxu0
      %v475 = vadd.f32 %v258, %v474
      %v476 = vpop.f32.mrb[0].mxu0
      %v477 = vadd.f32 %v262, %v476
      %v478 = vpop.f32.mrb[0].mxu0
      %v479 = vadd.f32 %v258, %v478
      %v480 = vpop.f32.mrb[0].mxu0
      %v481 = vadd.f32 %v262, %v480
      %482 = vmatprep.mubr.bf16.mxu0 0
      %483 = vmatmul.mubr.bf16.gmra.mrb[0].mxu0 %v378
      %v484 = vpop.f32.mrb[0].mxu0
      %v485 = vadd.f32 %v258, %v484
      %v486 = vpop.f32.mrb[0].mxu0
      %v487 = vadd.f32 %v262, %v486
      %v488 = vpop.f32.mrb[0].mxu0
      %v489 = vadd.f32 %v258, %v488
      %v490 = vpop.f32.mrb[0].mxu0
      %v491 = vadd.f32 %v262, %v490
      %492 = vdwg.mxu0
      %493 = vmatprep.subr.bf16.mxu0 %v342
      %494 = vmatpush1.bf16.msra.mxu0 %v341
      %495 = vmatprep.subr.bf16.mxu0 %v346
      %496 = vmatpush1.bf16.msra.mxu0 %v345
      %497 = vmatprep.subr.bf16.mxu0 0
      %498 = vmatpush1.bf16.msra.mxu0 0
      %499 = vmatprep.subr.bf16.mxu0 0
      %500 = vmatpush1.bf16.msra.mxu0 0
      %501 = vmatprep.subr.bf16.mxu0 0
      %502 = vmatpush1.bf16.msra.mxu0 0
      %503 = vmatprep.subr.bf16.mxu0 0
      %504 = vmatpush1.bf16.msra.mxu0 0
      %505 = vmatprep.subr.bf16.mxu0 0
      %506 = vmatpush1.bf16.msra.mxu0 0
      %507 = vmatprep.subr.bf16.mxu0 0
      %508 = vmatpush1.bf16.msra.mxu0 0
      %509 = vmatprep.subr.bf16.mxu0 0
      %510 = vmatpush1.bf16.msra.mxu0 0
      %511 = vmatprep.subr.bf16.mxu0 0
      %512 = vmatpush1.bf16.msra.mxu0 0
      %513 = vmatprep.subr.bf16.mxu0 0
      %514 = vmatpush1.bf16.msra.mxu0 0
      %515 = vmatprep.subr.bf16.mxu0 0
      %516 = vmatpush1.bf16.msra.mxu0 0
      %517 = vmatprep.subr.bf16.mxu0 0
      %518 = vmatpush1.bf16.msra.mxu0 0
      %519 = vmatprep.subr.bf16.mxu0 0
      %520 = vmatpush1.bf16.msra.mxu0 0
      %521 = vmatprep.subr.bf16.mxu0 0
      %522 = vmatpush1.bf16.msra.mxu0 0
      %523 = vmatprep.subr.bf16.mxu0 0
      %524 = vmatpush1.bf16.msra.mxu0 0
      %525 = vmatprep.mubr.bf16.mxu0 0
      %526 = vmatmul.mubr.bf16.gmra.mrb[0].mxu0 %v357
      %v527 = vpop.f32.mrb[0].mxu0
      %v528 = vadd.f32 %v266, %v527
      %v529 = vpop.f32.mrb[0].mxu0
      %v530 = vadd.f32 %v270, %v529
      %v531 = vpop.f32.mrb[0].mxu0
      %v532 = vadd.f32 %v266, %v531
      %v533 = vpop.f32.mrb[0].mxu0
      %v534 = vadd.f32 %v270, %v533
      %535 = vmatprep.mubr.bf16.mxu0 0
      %536 = vmatmul.mubr.bf16.gmra.mrb[0].mxu0 %v360
      %v537 = vpop.f32.mrb[0].mxu0
      %v538 = vadd.f32 %v266, %v537
      %v539 = vpop.f32.mrb[0].mxu0
      %v540 = vadd.f32 %v270, %v539
      %v541 = vpop.f32.mrb[0].mxu0
      %v542 = vadd.f32 %v266, %v541
      %v543 = vpop.f32.mrb[0].mxu0
      %v544 = vadd.f32 %v270, %v543
      %545 = vmatprep.mubr.bf16.mxu0 0
      %546 = vmatmul.mubr.bf16.gmra.mrb[0].mxu0 %v363
      %v547 = vpop.f32.mrb[0].mxu0
      %v548 = vadd.f32 %v266, %v547
      %v549 = vpop.f32.mrb[0].mxu0
      %v550 = vadd.f32 %v270, %v549
      %v551 = vpop.f32.mrb[0].mxu0
      %v552 = vadd.f32 %v266, %v551
      %v553 = vpop.f32.mrb[0].mxu0
      %v554 = vadd.f32 %v270, %v553
      %555 = vmatprep.mubr.bf16.mxu0 0
      %556 = vmatmul.mubr.bf16.gmra.mrb[0].mxu0 %v366
      %v557 = vpop.f32.mrb[0].mxu0
      %v558 = vadd.f32 %v266, %v557
      %v559 = vpop.f32.mrb[0].mxu0
      %v560 = vadd.f32 %v270, %v559
      %v561 = vpop.f32.mrb[0].mxu0
      %v562 = vadd.f32 %v266, %v561
      %v563 = vpop.f32.mrb[0].mxu0
      %v564 = vadd.f32 %v270, %v563
      %565 = vmatprep.mubr.bf16.mxu0 0
      %566 = vmatmul.mubr.bf16.gmra.mrb[0].mxu0 %v369
      %v567 = vpop.f32.mrb[0].mxu0
      %v568 = vadd.f32 %v266, %v567
      %v569 = vpop.f32.mrb[0].mxu0
      %v570 = vadd.f32 %v270, %v569
      %v571 = vpop.f32.mrb[0].mxu0
      %v572 = vadd.f32 %v266, %v571
      %v573 = vpop.f32.mrb[0].mxu0
      %v574 = vadd.f32 %v270, %v573
      %575 = vmatprep.mubr.bf16.mxu0 0
      %576 = vmatmul.mubr.bf16.gmra.mrb[0].mxu0 %v372
      %v577 = vpop.f32.mrb[0].mxu0
      %v578 = vadd.f32 %v266, %v577
      %v579 = vpop.f32.mrb[0].mxu0
      %v580 = vadd.f32 %v270, %v579
      %v581 = vpop.f32.mrb[0].mxu0
      %v582 = vadd.f32 %v266, %v581
      %v583 = vpop.f32.mrb[0].mxu0
      %v584 = vadd.f32 %v270, %v583
      %585 = vmatprep.mubr.bf16.mxu0 0
      %586 = vmatmul.mubr.bf16.gmra.mrb[0].mxu0 %v375
      %v587 = vpop.f32.mrb[0].mxu0
      %v588 = vadd.f32 %v266, %v587
      %v589 = vpop.f32.mrb[0].mxu0
      %v590 = vadd.f32 %v270, %v589
      %v591 = vpop.f32.mrb[0].mxu0
      %v592 = vadd.f32 %v266, %v591
      %v593 = vpop.f32.mrb[0].mxu0
      %v594 = vadd.f32 %v270, %v593
      %595 = vmatprep.mubr.bf16.mxu0 0
      %596 = vmatmul.mubr.bf16.gmra.mrb[0].mxu0 %v378
      %v597 = vpop.f32.mrb[0].mxu0
      %v598 = vadd.f32 %v266, %v597
      %v599 = vpop.f32.mrb[0].mxu0
      %v600 = vadd.f32 %v270, %v599
      %v601 = vpop.f32.mrb[0].mxu0
      %v602 = vadd.f32 %v266, %v601
      %v603 = vpop.f32.mrb[0].mxu0
      %v604 = vadd.f32 %v270, %v603
      %605 = vdwg.mxu0
      %v606 = vmax.f32 %v415, 0.0
      %v607 = vmax.f32 %v417, 0.0
      %v608 = vmax.f32 %v528, 0.0
      %v609 = vmax.f32 %v530, 0.0
      %v610 = vmax.f32 %v419, 0.0
      %v611 = vmax.f32 %v421, 0.0
      %v612 = vmax.f32 %v532, 0.0
      %v613 = vmax.f32 %v534, 0.0
      %v614 = vmax.f32 %v425, 0.0
      %v615 = vmax.f32 %v427, 0.0
      %v616 = vmax.f32 %v538, 0.0
      %v617 = vmax.f32 %v540, 0.0
      %v618 = vmax.f32 %v429, 0.0
      %v619 = vmax.f32 %v431, 0.0
      %v620 = vmax.f32 %v542, 0.0
      %v621 = vmax.f32 %v544, 0.0
      %v622 = vmax.f32 %v435, 0.0
      %v623 = vmax.f32 %v437, 0.0
      %v624 = vmax.f32 %v548, 0.0
      %v625 = vmax.f32 %v550, 0.0
      %v626 = vmax.f32 %v439, 0.0
      %v627 = vmax.f32 %v441, 0.0
      %v628 = vmax.f32 %v552, 0.0
      %v629 = vmax.f32 %v554, 0.0
      %v630 = vmax.f32 %v445, 0.0
      %v631 = vmax.f32 %v447, 0.0
      %v632 = vmax.f32 %v558, 0.0
      %v633 = vmax.f32 %v560, 0.0
      %v634 = vmax.f32 %v449, 0.0
      %v635 = vmax.f32 %v451, 0.0
      %v636 = vmax.f32 %v562, 0.0
      %v637 = vmax.f32 %v564, 0.0
      %v638 = vmax.f32 %v455, 0.0
      %v639 = vmax.f32 %v457, 0.0
      %v640 = vmax.f32 %v568, 0.0
      %v641 = vmax.f32 %v570, 0.0
      %v642 = vmax.f32 %v459, 0.0
      %v643 = vmax.f32 %v461, 0.0
      %v644 = vmax.f32 %v572, 0.0
      %v645 = vmax.f32 %v574, 0.0
      %v646 = vmax.f32 %v465, 0.0
      %v647 = vmax.f32 %v467, 0.0
      %v648 = vmax.f32 %v578, 0.0
      %v649 = vmax.f32 %v580, 0.0
      %v650 = vmax.f32 %v469, 0.0
      %v651 = vmax.f32 %v471, 0.0
      %v652 = vmax.f32 %v582, 0.0
      %v653 = vmax.f32 %v584, 0.0
      %v654 = vmax.f32 %v475, 0.0
      %v655 = vmax.f32 %v477, 0.0
      %v656 = vmax.f32 %v588, 0.0
      %v657 = vmax.f32 %v590, 0.0
      %v658 = vmax.f32 %v479, 0.0
      %v659 = vmax.f32 %v481, 0.0
      %v660 = vmax.f32 %v592, 0.0
      %v661 = vmax.f32 %v594, 0.0
      %v662 = vmax.f32 %v485, 0.0
      %v663 = vmax.f32 %v487, 0.0
      %v664 = vmax.f32 %v598, 0.0
      %v665 = vmax.f32 %v600, 0.0
      %v666 = vmax.f32 %v489, 0.0
      %v667 = vmax.f32 %v491, 0.0
      %v668 = vmax.f32 %v602, 0.0
      %v669 = vmax.f32 %v604, 0.0
      %v670 = vpack.c.bf16 %v610, %v606
      %v671 = vpack.c.bf16 %v611, %v607
      %v672 = vpack.c.bf16 %v612, %v608
      %v673 = vpack.c.bf16 %v613, %v609
      %v674 = vpack.c.bf16 %v618, %v614
      %v675 = vpack.c.bf16 %v619, %v615
      %v676 = vpack.c.bf16 %v620, %v616
      %v677 = vpack.c.bf16 %v621, %v617
      %v678 = vpack.c.bf16 %v626, %v622
      %v679 = vpack.c.bf16 %v627, %v623
      %v680 = vpack.c.bf16 %v628, %v624
      %v681 = vpack.c.bf16 %v629, %v625
      %v682 = vpack.c.bf16 %v634, %v630
      %v683 = vpack.c.bf16 %v635, %v631
      %v684 = vpack.c.bf16 %v636, %v632
      %v685 = vpack.c.bf16 %v637, %v633
      %v686 = vpack.c.bf16 %v642, %v638
      %v687 = vpack.c.bf16 %v643, %v639
      %v688 = vpack.c.bf16 %v644, %v640
      %v689 = vpack.c.bf16 %v645, %v641
      %v690 = vpack.c.bf16 %v650, %v646
      %v691 = vpack.c.bf16 %v651, %v647
      %v692 = vpack.c.bf16 %v652, %v648
      %v693 = vpack.c.bf16 %v653, %v649
      %v694 = vpack.c.bf16 %v658, %v654
      %v695 = vpack.c.bf16 %v659, %v655
      %v696 = vpack.c.bf16 %v660, %v656
      %v697 = vpack.c.bf16 %v661, %v657
      %v698 = vpack.c.bf16 %v666, %v662
      %v699 = vpack.c.bf16 %v667, %v663
      %v700 = vpack.c.bf16 %v668, %v664
      %v701 = vpack.c.bf16 %v669, %v665
      %v702 = vld [vmem:[%s3] sm:$0xf]
      %v703 = vld [vmem:[%s3 + $0x4] sm:$0xf]
      %v704 = vld [vmem:[%s3 + $0x8] sm:$0xf]
      %v705 = vld [vmem:[%s3 + $0xc] sm:$0xf]
      %v706 = vld [vmem:[%s3 + $0x10] sm:$0xf]
      %v707 = vld [vmem:[%s3 + $0x14] sm:$0xf]
      %v708 = vld [vmem:[%s3 + $0x18] sm:$0xf]
      %v709 = vld [vmem:[%s3 + $0x1c] sm:$0xf]
      %v710 = vld [vmem:[%s3 + $0x20] sm:$0xf]
      %v711 = vld [vmem:[%s3 + $0x24] sm:$0xf]
      %v712 = vld [vmem:[%s3 + $0x28] sm:$0xf]
      %v713 = vld [vmem:[%s3 + $0x2c] sm:$0xf]
      %v714 = vld [vmem:[%s3 + $0x30] sm:$0xf]
      %v715 = vld [vmem:[%s3 + $0x34] sm:$0xf]
      %v716 = vld [vmem:[%s3 + $0x38] sm:$0xf]
      %v717 = vld [vmem:[%s3 + $0x3c] sm:$0xf]
      %v718 = vld [vmem:[%s3 + $0x40] sm:$0xf]
      %v719 = vld [vmem:[%s3 + $0x44] sm:$0xf]
      %v720 = vld [vmem:[%s3 + $0x48] sm:$0xf]
      %v721 = vld [vmem:[%s3 + $0x4c] sm:$0xf]
      %v722 = vld [vmem:[%s3 + $0x50] sm:$0xf]
      %v723 = vld [vmem:[%s3 + $0x54] sm:$0xf]
      %v724 = vld [vmem:[%s3 + $0x58] sm:$0xf]
      %v725 = vld [vmem:[%s3 + $0x5c] sm:$0xf]
      %v726 = vld [vmem:[%s3 + $0x60] sm:$0xf]
      %v727 = vld [vmem:[%s3 + $0x64] sm:$0xf]
      %v728 = vld [vmem:[%s3 + $0x68] sm:$0xf]
      %v729 = vld [vmem:[%s3 + $0x6c] sm:$0xf]
      %v730 = vld [vmem:[%s3 + $0x70] sm:$0xf]
      %v731 = vld [vmem:[%s3 + $0x74] sm:$0xf]
      %v732 = vld [vmem:[%s3 + $0x78] sm:$0xf]
      %v733 = vld [vmem:[%s3 + $0x7c] sm:$0xf]
      %v734 = vld [vmem:[%s3 + $0x80] sm:$0xf]
      %v735 = vld [vmem:[%s3 + $0x84] sm:$0xf]
      %v736 = vld [vmem:[%s3 + $0x88] sm:$0xf]
      %v737 = vld [vmem:[%s3 + $0x8c] sm:$0xf]
      %v738 = vld [vmem:[%s3 + $0x90] sm:$0xf]
      %v739 = vld [vmem:[%s3 + $0x94] sm:$0xf]
      %v740 = vld [vmem:[%s3 + $0x98] sm:$0xf]
      %v741 = vld [vmem:[%s3 + $0x9c] sm:$0xf]
      %v742 = vld [vmem:[%s3 + $0xa0] sm:$0xf]
      %v743 = vld [vmem:[%s3 + $0xa4] sm:$0xf]
      %v744 = vld [vmem:[%s3 + $0xa8] sm:$0xf]
      %v745 = vld [vmem:[%s3 + $0xac] sm:$0xf]
      %v746 = vld [vmem:[%s3 + $0xb0] sm:$0xf]
      %v747 = vld [vmem:[%s3 + $0xb4] sm:$0xf]
      %v748 = vld [vmem:[%s3 + $0xb8] sm:$0xf]
      %v749 = vld [vmem:[%s3 + $0xbc] sm:$0xf]
      %v750 = vld [vmem:[%s3 + $0xc0] sm:$0xf]
      %v751 = vld [vmem:[%s3 + $0xc4] sm:$0xf]
      %v752 = vld [vmem:[%s3 + $0xc8] sm:$0xf]
      %v753 = vld [vmem:[%s3 + $0xcc] sm:$0xf]
      %v754 = vld [vmem:[%s3 + $0xd0] sm:$0xf]
      %v755 = vld [vmem:[%s3 + $0xd4] sm:$0xf]
      %v756 = vld [vmem:[%s3 + $0xd8] sm:$0xf]
      %v757 = vld [vmem:[%s3 + $0xdc] sm:$0xf]
      %v758 = vld [vmem:[%s3 + $0xe0] sm:$0xf]
      %v759 = vld [vmem:[%s3 + $0xe4] sm:$0xf]
      %v760 = vld [vmem:[%s3 + $0xe8] sm:$0xf]
      %v761 = vld [vmem:[%s3 + $0xec] sm:$0xf]
      %v762 = vld [vmem:[%s3 + $0xf0] sm:$0xf]
      %v763 = vld [vmem:[%s3 + $0xf4] sm:$0xf]
      %v764 = vld [vmem:[%s3 + $0xf8] sm:$0xf]
      %v765 = vld [vmem:[%s3 + $0xfc] sm:$0xf]
      %v766 = vld [vmem:[%s4] sm:$0x1]
      %v768 = vlaneseq
      %v769 = vshrl.u32 %v768, 7
      %v770 = vsub.s32 0, %v769
      %v771 = vrot.slane %v766, %v770
      %v837 = vunpack.c.l.b16 %v702
      %v838 = vunpack.c.l.b16 %v703
      %v839 = vunpack.c.l.b16 %v704
      %v840 = vunpack.c.l.b16 %v705
      %v841 = vunpack.c.l.b16 %v706
      %v842 = vunpack.c.l.b16 %v707
      %v843 = vunpack.c.l.b16 %v708
      %v844 = vunpack.c.l.b16 %v709
      %v845 = vunpack.c.l.b16 %v710
      %v846 = vunpack.c.l.b16 %v711
      %v847 = vunpack.c.l.b16 %v712
      %v848 = vunpack.c.l.b16 %v713
      %v849 = vunpack.c.l.b16 %v714
      %v850 = vunpack.c.l.b16 %v715
      %v851 = vunpack.c.l.b16 %v716
      %v852 = vunpack.c.l.b16 %v717
      %v853 = vunpack.c.l.b16 %v718
      %v854 = vunpack.c.l.b16 %v719
      %v855 = vunpack.c.l.b16 %v720
      %v856 = vunpack.c.l.b16 %v721
      %v857 = vunpack.c.l.b16 %v722
      %v858 = vunpack.c.l.b16 %v723
      %v859 = vunpack.c.l.b16 %v724
      %v860 = vunpack.c.l.b16 %v725
      %v861 = vunpack.c.l.b16 %v726
      %v862 = vunpack.c.l.b16 %v727
      %v863 = vunpack.c.l.b16 %v728
      %v864 = vunpack.c.l.b16 %v729
      %v865 = vunpack.c.l.b16 %v730
      %v866 = vunpack.c.l.b16 %v731
      %v867 = vunpack.c.l.b16 %v732
      %v868 = vunpack.c.l.b16 %v733
      %v869 = vunpack.c.l.b16 %v734
      %v870 = vunpack.c.l.b16 %v735
      %v871 = vunpack.c.l.b16 %v736
      %v872 = vunpack.c.l.b16 %v737
      %v873 = vunpack.c.l.b16 %v738
      %v874 = vunpack.c.l.b16 %v739
      %v875 = vunpack.c.l.b16 %v740
      %v876 = vunpack.c.l.b16 %v741
      %v877 = vunpack.c.l.b16 %v742
      %v878 = vunpack.c.l.b16 %v743
      %v879 = vunpack.c.l.b16 %v744
      %v880 = vunpack.c.l.b16 %v745
      %v881 = vunpack.c.l.b16 %v746
      %v882 = vunpack.c.l.b16 %v747
      %v883 = vunpack.c.l.b16 %v748
      %v884 = vunpack.c.l.b16 %v749
      %v885 = vunpack.c.l.b16 %v750
      %v886 = vunpack.c.l.b16 %v751
      %v887 = vunpack.c.l.b16 %v752
      %v888 = vunpack.c.l.b16 %v753
      %v889 = vunpack.c.l.b16 %v754
      %v890 = vunpack.c.l.b16 %v755
      %v891 = vunpack.c.l.b16 %v756
      %v892 = vunpack.c.l.b16 %v757
      %v893 = vunpack.c.l.b16 %v758
      %v894 = vunpack.c.l.b16 %v759
      %v895 = vunpack.c.l.b16 %v760
      %v896 = vunpack.c.l.b16 %v761
      %v897 = vunpack.c.l.b16 %v762
      %v898 = vunpack.c.l.b16 %v763
      %v899 = vunpack.c.l.b16 %v764
      %v900 = vunpack.c.l.b16 %v765
      %v901 = vpack.c.b16 %v838, %v837
      %v902 = vpack.c.b16 %v840, %v839
      %v903 = vpack.c.b16 %v842, %v841
      %v904 = vpack.c.b16 %v844, %v843
      %v905 = vpack.c.b16 %v846, %v845
      %v906 = vpack.c.b16 %v848, %v847
      %v907 = vpack.c.b16 %v850, %v849
      %v908 = vpack.c.b16 %v852, %v851
      %v909 = vpack.c.b16 %v854, %v853
      %v910 = vpack.c.b16 %v856, %v855
      %v911 = vpack.c.b16 %v858, %v857
      %v912 = vpack.c.b16 %v860, %v859
      %v913 = vpack.c.b16 %v862, %v861
      %v914 = vpack.c.b16 %v864, %v863
      %v915 = vpack.c.b16 %v866, %v865
      %v916 = vpack.c.b16 %v868, %v867
      %v917 = vpack.c.b16 %v870, %v869
      %v918 = vpack.c.b16 %v872, %v871
      %v919 = vpack.c.b16 %v874, %v873
      %v920 = vpack.c.b16 %v876, %v875
      %v921 = vpack.c.b16 %v878, %v877
      %v922 = vpack.c.b16 %v880, %v879
      %v923 = vpack.c.b16 %v882, %v881
      %v924 = vpack.c.b16 %v884, %v883
      %v925 = vpack.c.b16 %v886, %v885
      %v926 = vpack.c.b16 %v888, %v887
      %v927 = vpack.c.b16 %v890, %v889
      %v928 = vpack.c.b16 %v892, %v891
      %v929 = vpack.c.b16 %v894, %v893
      %v930 = vpack.c.b16 %v896, %v895
      %v931 = vpack.c.b16 %v898, %v897
      %v932 = vpack.c.b16 %v900, %v899
      %965 = vmatprep.subr.bf16.mxu0 0
      %966 = vmatpush1.bf16.msra.mxu0 %v901
      %967 = vmatprep.subr.bf16.mxu0 0
      %968 = vmatpush1.bf16.msra.mxu0 %v902
      %969 = vmatprep.subr.bf16.mxu0 0
      %970 = vmatpush1.bf16.msra.mxu0 %v903
      %971 = vmatprep.subr.bf16.mxu0 0
      %972 = vmatpush1.bf16.msra.mxu0 %v904
      %973 = vmatprep.subr.bf16.mxu0 0
      %974 = vmatpush1.bf16.msra.mxu0 %v905
      %975 = vmatprep.subr.bf16.mxu0 0
      %976 = vmatpush1.bf16.msra.mxu0 %v906
      %977 = vmatprep.subr.bf16.mxu0 0
      %978 = vmatpush1.bf16.msra.mxu0 %v907
      %979 = vmatprep.subr.bf16.mxu0 0
      %980 = vmatpush1.bf16.msra.mxu0 %v908
      %981 = vmatprep.subr.bf16.mxu0 0
      %982 = vmatpush1.bf16.msra.mxu0 %v909
      %983 = vmatprep.subr.bf16.mxu0 0
      %984 = vmatpush1.bf16.msra.mxu0 %v910
      %985 = vmatprep.subr.bf16.mxu0 0
      %986 = vmatpush1.bf16.msra.mxu0 %v911
      %987 = vmatprep.subr.bf16.mxu0 0
      %988 = vmatpush1.bf16.msra.mxu0 %v912
      %989 = vmatprep.subr.bf16.mxu0 0
      %990 = vmatpush1.bf16.msra.mxu0 %v913
      %991 = vmatprep.subr.bf16.mxu0 0
      %992 = vmatpush1.bf16.msra.mxu0 %v914
      %993 = vmatprep.subr.bf16.mxu0 0
      %994 = vmatpush1.bf16.msra.mxu0 %v915
      %995 = vmatprep.subr.bf16.mxu0 0
      %996 = vmatpush1.bf16.msra.mxu0 %v916
      %997 = vmatprep.mubr.bf16.mxu0 %v671
      %998 = vmatmul.mubr.bf16.gmra.mrb[0].mxu0 %v670
      %v999 = vpop.f32.mrb[0].mxu0
      %v1000 = vadd.f32 %v771, %v999
      %v1001 = vpop.f32.mrb[0].mxu0
      %v1002 = vpop.f32.mrb[0].mxu0
      %v1003 = vadd.f32 %v771, %v1002
      %v1004 = vpop.f32.mrb[0].mxu0
      %1005 = vmatprep.mubr.bf16.mxu0 %v675
      %1006 = vmatmul.mubr.bf16.gmra.mrb[0].mxu0 %v674
      %v1007 = vpop.f32.mrb[0].mxu0
      %v1008 = vadd.f32 %v771, %v1007
      %v1009 = vpop.f32.mrb[0].mxu0
      %v1010 = vpop.f32.mrb[0].mxu0
      %v1011 = vadd.f32 %v771, %v1010
      %v1012 = vpop.f32.mrb[0].mxu0
      %1013 = vmatprep.mubr.bf16.mxu0 %v679
      %1014 = vmatmul.mubr.bf16.gmra.mrb[0].mxu0 %v678
      %v1015 = vpop.f32.mrb[0].mxu0
      %v1016 = vadd.f32 %v771, %v1015
      %v1017 = vpop.f32.mrb[0].mxu0
      %v1018 = vpop.f32.mrb[0].mxu0
      %v1019 = vadd.f32 %v771, %v1018
      %v1020 = vpop.f32.mrb[0].mxu0
      %1021 = vmatprep.mubr.bf16.mxu0 %v683
      %1022 = vmatmul.mubr.bf16.gmra.mrb[0].mxu0 %v682
      %v1023 = vpop.f32.mrb[0].mxu0
      %v1024 = vadd.f32 %v771, %v1023
      %v1025 = vpop.f32.mrb[0].mxu0
      %v1026 = vpop.f32.mrb[0].mxu0
      %v1027 = vadd.f32 %v771, %v1026
      %v1028 = vpop.f32.mrb[0].mxu0
      %1029 = vmatprep.mubr.bf16.mxu0 %v687
      %1030 = vmatmul.mubr.bf16.gmra.mrb[0].mxu0 %v686
      %v1031 = vpop.f32.mrb[0].mxu0
      %v1032 = vadd.f32 %v771, %v1031
      %v1033 = vpop.f32.mrb[0].mxu0
      %v1034 = vpop.f32.mrb[0].mxu0
      %v1035 = vadd.f32 %v771, %v1034
      %v1036 = vpop.f32.mrb[0].mxu0
      %1037 = vmatprep.mubr.bf16.mxu0 %v691
      %1038 = vmatmul.mubr.bf16.gmra.mrb[0].mxu0 %v690
      %v1039 = vpop.f32.mrb[0].mxu0
      %v1040 = vadd.f32 %v771, %v1039
      %v1041 = vpop.f32.mrb[0].mxu0
      %v1042 = vpop.f32.mrb[0].mxu0
      %v1043 = vadd.f32 %v771, %v1042
      %v1044 = vpop.f32.mrb[0].mxu0
      %1045 = vmatprep.mubr.bf16.mxu0 %v695
      %1046 = vmatmul.mubr.bf16.gmra.mrb[0].mxu0 %v694
      %v1047 = vpop.f32.mrb[0].mxu0
      %v1048 = vadd.f32 %v771, %v1047
      %v1049 = vpop.f32.mrb[0].mxu0
      %v1050 = vpop.f32.mrb[0].mxu0
      %v1051 = vadd.f32 %v771, %v1050
      %v1052 = vpop.f32.mrb[0].mxu0
      %1053 = vmatprep.mubr.bf16.mxu0 %v699
      %1054 = vmatmul.mubr.bf16.gmra.mrb[0].mxu0 %v698
      %v1055 = vpop.f32.mrb[0].mxu0
      %v1056 = vadd.f32 %v771, %v1055
      %v1057 = vpop.f32.mrb[0].mxu0
      %v1058 = vpop.f32.mrb[0].mxu0
      %v1059 = vadd.f32 %v771, %v1058
      %v1060 = vpop.f32.mrb[0].mxu0
      %1061 = vdwg.mxu0
      %1062 = vmatprep.subr.bf16.mxu0 0
      %1063 = vmatpush1.bf16.msra.mxu0 %v917
      %1064 = vmatprep.subr.bf16.mxu0 0
      %1065 = vmatpush1.bf16.msra.mxu0 %v918
      %1066 = vmatprep.subr.bf16.mxu0 0
      %1067 = vmatpush1.bf16.msra.mxu0 %v919
      %1068 = vmatprep.subr.bf16.mxu0 0
      %1069 = vmatpush1.bf16.msra.mxu0 %v920
      %1070 = vmatprep.subr.bf16.mxu0 0
      %1071 = vmatpush1.bf16.msra.mxu0 %v921
      %1072 = vmatprep.subr.bf16.mxu0 0
      %1073 = vmatpush1.bf16.msra.mxu0 %v922
      %1074 = vmatprep.subr.bf16.mxu0 0
      %1075 = vmatpush1.bf16.msra.mxu0 %v923
      %1076 = vmatprep.subr.bf16.mxu0 0
      %1077 = vmatpush1.bf16.msra.mxu0 %v924
      %1078 = vmatprep.subr.bf16.mxu0 0
      %1079 = vmatpush1.bf16.msra.mxu0 %v925
      %1080 = vmatprep.subr.bf16.mxu0 0
      %1081 = vmatpush1.bf16.msra.mxu0 %v926
      %1082 = vmatprep.subr.bf16.mxu0 0
      %1083 = vmatpush1.bf16.msra.mxu0 %v927
      %1084 = vmatprep.subr.bf16.mxu0 0
      %1085 = vmatpush1.bf16.msra.mxu0 %v928
      %1086 = vmatprep.subr.bf16.mxu0 0
      %1087 = vmatpush1.bf16.msra.mxu0 %v929
      %1088 = vmatprep.subr.bf16.mxu0 0
      %1089 = vmatpush1.bf16.msra.mxu0 %v930
      %1090 = vmatprep.subr.bf16.mxu0 0
      %1091 = vmatpush1.bf16.msra.mxu0 %v931
      %1092 = vmatprep.subr.bf16.mxu0 0
      %1093 = vmatpush1.bf16.msra.mxu0 %v932
      %1094 = vmatprep.mubr.bf16.mxu0 %v673
      %1095 = vmatmul.mubr.bf16.gmra.mrb[0].mxu0 %v672
      %v1096 = vpop.f32.mrb[0].mxu0
      %v1097 = vadd.f32 %v1000, %v1096
      %v1098 = vpop.f32.mrb[0].mxu0
      %v1099 = vpop.f32.mrb[0].mxu0
      %v1100 = vadd.f32 %v1003, %v1099
      %v1101 = vpop.f32.mrb[0].mxu0
      %1102 = vmatprep.mubr.bf16.mxu0 %v677
      %1103 = vmatmul.mubr.bf16.gmra.mrb[0].mxu0 %v676
      %v1104 = vpop.f32.mrb[0].mxu0
      %v1105 = vadd.f32 %v1008, %v1104
      %v1106 = vpop.f32.mrb[0].mxu0
      %v1107 = vpop.f32.mrb[0].mxu0
      %v1108 = vadd.f32 %v1011, %v1107
      %v1109 = vpop.f32.mrb[0].mxu0
      %1110 = vmatprep.mubr.bf16.mxu0 %v681
      %1111 = vmatmul.mubr.bf16.gmra.mrb[0].mxu0 %v680
      %v1112 = vpop.f32.mrb[0].mxu0
      %v1113 = vadd.f32 %v1016, %v1112
      %v1114 = vpop.f32.mrb[0].mxu0
      %v1115 = vpop.f32.mrb[0].mxu0
      %v1116 = vadd.f32 %v1019, %v1115
      %v1117 = vpop.f32.mrb[0].mxu0
      %1118 = vmatprep.mubr.bf16.mxu0 %v685
      %1119 = vmatmul.mubr.bf16.gmra.mrb[0].mxu0 %v684
      %v1120 = vpop.f32.mrb[0].mxu0
      %v1121 = vadd.f32 %v1024, %v1120
      %v1122 = vpop.f32.mrb[0].mxu0
      %v1123 = vpop.f32.mrb[0].mxu0
      %v1124 = vadd.f32 %v1027, %v1123
      %v1125 = vpop.f32.mrb[0].mxu0
      %1126 = vmatprep.mubr.bf16.mxu0 %v689
      %1127 = vmatmul.mubr.bf16.gmra.mrb[0].mxu0 %v688
      %v1128 = vpop.f32.mrb[0].mxu0
      %v1129 = vadd.f32 %v1032, %v1128
      %v1130 = vpop.f32.mrb[0].mxu0
      %v1131 = vpop.f32.mrb[0].mxu0
      %v1132 = vadd.f32 %v1035, %v1131
      %v1133 = vpop.f32.mrb[0].mxu0
      %1134 = vmatprep.mubr.bf16.mxu0 %v693
      %1135 = vmatmul.mubr.bf16.gmra.mrb[0].mxu0 %v692
      %v1136 = vpop.f32.mrb[0].mxu0
      %v1137 = vadd.f32 %v1040, %v1136
      %v1138 = vpop.f32.mrb[0].mxu0
      %v1139 = vpop.f32.mrb[0].mxu0
      %v1140 = vadd.f32 %v1043, %v1139
      %v1141 = vpop.f32.mrb[0].mxu0
      %1142 = vmatprep.mubr.bf16.mxu0 %v697
      %1143 = vmatmul.mubr.bf16.gmra.mrb[0].mxu0 %v696
      %v1144 = vpop.f32.mrb[0].mxu0
      %v1145 = vadd.f32 %v1048, %v1144
      %v1146 = vpop.f32.mrb[0].mxu0
      %v1147 = vpop.f32.mrb[0].mxu0
      %v1148 = vadd.f32 %v1051, %v1147
      %v1149 = vpop.f32.mrb[0].mxu0
      %1150 = vmatprep.mubr.bf16.mxu0 %v701
      %1151 = vmatmul.mubr.bf16.gmra.mrb[0].mxu0 %v700
      %v1152 = vpop.f32.mrb[0].mxu0
      %v1153 = vadd.f32 %v1056, %v1152
      %v1154 = vpop.f32.mrb[0].mxu0
      %v1155 = vpop.f32.mrb[0].mxu0
      %v1156 = vadd.f32 %v1059, %v1155
      %v1157 = vpop.f32.mrb[0].mxu0
      %1158 = vdwg.mxu0
      %1159 = vst [vmem:[%s226] sm:$0xff] %v1097
      %1160 = vst [vmem:[%s226 + $0x8] sm:$0xff] %v1100
      %1161 = vst [vmem:[%s226 + $0x10] sm:$0xff] %v1105
      %1162 = vst [vmem:[%s226 + $0x18] sm:$0xff] %v1108
      %1163 = vst [vmem:[%s226 + $0x20] sm:$0xff] %v1113
      %1164 = vst [vmem:[%s226 + $0x28] sm:$0xff] %v1116
      %1165 = vst [vmem:[%s226 + $0x30] sm:$0xff] %v1121
      %1166 = vst [vmem:[%s226 + $0x38] sm:$0xff] %v1124
      %1167 = vst [vmem:[%s226 + $0x40] sm:$0xff] %v1129
      %1168 = vst [vmem:[%s226 + $0x48] sm:$0xff] %v1132
      %1169 = vst [vmem:[%s226 + $0x50] sm:$0xff] %v1137
      %1170 = vst [vmem:[%s226 + $0x58] sm:$0xff] %v1140
      %1171 = vst [vmem:[%s226 + $0x60] sm:$0xff] %v1145
      %1172 = vst [vmem:[%s226 + $0x68] sm:$0xff] %v1148
      %1173 = vst [vmem:[%s226 + $0x70] sm:$0xff] %v1153
      %1174 = vst [vmem:[%s226 + $0x78] sm:$0xff] %v1156
      %s1175 = smul.u32 16, %s16
      %p1176 = scmp.lt.s32.totalorder %s1175, 31
      %s1177 = scalar_select %p1176, %s1175, 31
      %s1178 = smul.addr %s1177, 8
      %s1179 = scalar_lea.vmem %s5, %s1178
      // Predicated region
      $region41: #{mlp_forward.1} parent=39 // pred_check
        %p1180 = pneg %p144
      $region42: #{mlp_forward.1} parent=39 // pred_check_branch
        %1182 = sbr.rel (%p1180) target = $region44
      $region43: #{mlp_forward.1} parent=39 // pred_region
        %s1183 = smul.u32 16, %s16
      $region44: #{mlp_forward.1} parent=39 // pred_fallthru
        _
    $region40: #{mlp_forward.1} parent=5 // pred_fallthru
      _
    %p1184 = scmp.le.s32.totalorder 2, %s11
    // Predicated region
    $region45: #{mlp_forward.1} parent=5 // pred_check
      %p1185 = pneg %p1184
    $region46: #{mlp_forward.1} parent=5 // pred_check_branch
      %1187 = sbr.rel (%p1185) target = $region48
    $region47: #{mlp_forward.1} parent=5 // pred_region
      %s1188 = ssub.s32 %s11, 2
      // Predicated region
      $region49: #{mlp_forward.1} parent=47 // pred_check
        %p1189 = pneg %p150
      $region50: #{mlp_forward.1} parent=47 // pred_check_branch
        %1191 = sbr.rel (%p1189) target = $region52
      $region51: #{mlp_forward.1} parent=47 // pred_region
        %s1192 = smul.u32 16, %s17
        %p1193 = scmp.lt.s32.totalorder %s1192, 31
        %s1194 = scalar_select %p1193, %s1192, 31
        %s1195 = smul.addr %s1194, 8
        %s1196 = scalar_lea.vmem %s5, %s1195
      $region52: #{mlp_forward.1} parent=47 // pred_fallthru
        _
    $region48: #{mlp_forward.1} parent=5 // pred_fallthru
      _
  $region6: #{mlp_forward.1} parent=0 // loop_footer
    %s15 = sadd.s32 1, %s11
  $region7: #{mlp_forward.1} parent=0 // loop_footer_branch
    %10 = sbr.rel target = $region3
  $region8: #{mlp_forward.1} parent=0 // loop_exit
    _

</llo_original>
